<compile_context>
chip_gen: v7x
topology: tpu7x:2x2x1
jax: 0.10.0
libtpu: 0.0.40
codegen_flags: <defaults>
</compile_context>

<pallas_src>
import jax
import jax.numpy as jnp
from jax import lax
from jax.experimental import pallas as pl
from jax.experimental.pallas import tpu as pltpu


def _activation(name):
    if name == "tanh":
        return jnp.tanh
    if name == "relu":
        return lambda x: jnp.maximum(x, 0.0)
    if name == "leaky_relu":
        return lambda x: jnp.where(x >= 0, x, 0.01 * x)  # torch default slope
    raise RuntimeError("Unknown activation function: %s" % name)


def _round_up(x, m):
    return ((x + m - 1) // m) * m


def _choose_tiles(M, L):
    """Pick padded size Mp and (tile_i, tile_j) for the 2-D grid."""
    Mp = _round_up(max(M, 1), 8)
    if Mp <= 128:
        tile_i = tile_j = Mp
    elif Mp <= 512:
        Mp = _round_up(Mp, 128)
        tile_i, tile_j = 128, Mp
    else:
        Mp = _round_up(Mp, 512)
        tile_i, tile_j = 128, 512
    # Keep the double-buffered output block <= ~16 MiB so tiles also fit the
    # v7x 64 MiB VMEM budget for large label sets (tile_i is a leading dim, so
    # shrinking it has no (8,128) constraint beyond staying a multiple of 8).
    while tile_i > 8 and tile_i % 16 == 0 and 2 * tile_i * L * tile_j * 4 > (16 << 20):
        tile_i //= 2
    return Mp, tile_i, tile_j


def _make_kernel(activation_name, span_bias, label_bias, tile_i):
    act = _activation(activation_name)

    def kernel(*refs):
        idx = 0
        g_i_ref = refs[idx]; idx += 1        # (TI, R)  projected fenceposts, i tile
        g_j_ref = refs[idx]; idx += 1        # (TJ, R)  projected fenceposts, j tile
        b_ref = refs[idx]; idx += 1          # (1, R)   label_output_mlp bias
        pT_ref = refs[idx]; idx += 1         # (L, R)   label_output_projection^T
        if span_bias:
            gs_i_ref = refs[idx]; idx += 1   # (TI, R)
            gs_j_ref = refs[idx]; idx += 1   # (TJ, R)
            bs_ref = refs[idx]; idx += 1     # (1, R)
            psT_ref = refs[idx]; idx += 1    # (1, R)
        if label_bias:
            obT_ref = refs[idx]; idx += 1    # (L, 1)
        out_ref = refs[idx]                  # (TI, L, TJ)   lane axis = j (dense)

        # Hoist loop-invariant loads; fold the MLP bias into the j-side term
        # (act(g_j - g_i + b) == act((g_j + b) - g_i)).
        gj = g_j_ref[...] + b_ref[...]       # (TJ, R)
        pT = pT_ref[...]                     # (L, R)
        if span_bias:
            gsj = gs_j_ref[...] + bs_ref[...]
            psT = psT_ref[...]
        if label_bias:
            obT = obT_ref[...]

        # Contract the R (lane) axis of both operands: (L,R) x (TJ,R)^T -> (L,TJ).
        ddn = (((1,), (1,)), ((), ()))

        def row(il, carry):
            gi = g_i_ref[pl.ds(il, 1), :]                          # (1, R)
            h = act(gj - gi)                                       # (TJ, R)
            out_row = lax.dot_general(pT, h, ddn,
                                      preferred_element_type=jnp.float32)  # (L, TJ)
            if span_bias:
                gsi = gs_i_ref[pl.ds(il, 1), :]
                hs = act(gsj - gsi)                                # (TJ, R)
                out_row = out_row + lax.dot_general(
                    psT, hs, ddn, preferred_element_type=jnp.float32)      # (1, TJ)
            if label_bias:
                out_row = out_row + obT                            # (L, 1) broadcast
            out_ref[il, :, :] = out_row.astype(out_ref.dtype)
            return carry

        lax.fori_loop(0, tile_i, row, 0, unroll=tile_i <= 8)

    return kernel


def fencepost_forward(x, params, *, disentangle=False, span_bias=False,
                      label_bias=True, activation="tanh"):
    """Pallas implementation of FencepostModule.forward.

    x: (n_words + 2, input_dim) float32
    returns: (M, M, n_labels) with M = n_words + 1
    """
    T, D = x.shape
    M = T - 1
    if disentangle:  # glue: column permutation, done in plain JAX
        x = jnp.concatenate([x[:, 0::2], x[:, 1::2]], axis=1)
    half = D // 2
    # fencepost_annotations = cat([input[:-1, :D/2], -input[1:, D/2:]], 1)
    f = jnp.concatenate([x[:-1, :half], -x[1:, half:]], axis=1)           # (M, D)

    L = params["label_proj"].shape[1]
    R = params["label_w"].shape[0]
    Mp, tile_i, tile_j = _choose_tiles(M, L)
    f_pad = jnp.pad(f, ((0, Mp - M), (0, 0)))

    # Distribute the linear layer over the fencepost difference (one small
    # O(M*D*R) matmul here; HIGHEST is negligible at this size and keeps the
    # numerics close to the f32 reference).  The kernel only sees (*, R) blocks.
    g = jnp.dot(f_pad, params["label_w"].T,
                precision=lax.Precision.HIGHEST)                          # (Mp, R)
    b = params["label_b"].reshape(1, R).astype(jnp.float32)
    pT = params["label_proj"].T.astype(jnp.float32)                       # (L, R)

    inputs = [g, g, b, pT]
    in_specs = [
        pl.BlockSpec((tile_i, R), lambda i, j: (i, 0)),   # i-tile of projected f
        pl.BlockSpec((tile_j, R), lambda i, j: (j, 0)),   # j-tile of projected f
        pl.BlockSpec((1, R), lambda i, j: (0, 0)),
        pl.BlockSpec((L, R), lambda i, j: (0, 0)),
    ]
    if span_bias:
        Rs = params["span_w"].shape[0]
        gs = jnp.dot(f_pad, params["span_w"].T,
                     precision=lax.Precision.HIGHEST)                     # (Mp, Rs)
        bs = params["span_b"].reshape(1, Rs).astype(jnp.float32)
        psT = params["span_proj"].T.astype(jnp.float32)                   # (1, Rs)
        inputs += [gs, gs, bs, psT]
        in_specs += [
            pl.BlockSpec((tile_i, Rs), lambda i, j: (i, 0)),
            pl.BlockSpec((tile_j, Rs), lambda i, j: (j, 0)),
            pl.BlockSpec((1, Rs), lambda i, j: (0, 0)),
            pl.BlockSpec((1, Rs), lambda i, j: (0, 0)),
        ]
    if label_bias:
        obT = params["output_bias"].reshape(1, L).T.astype(jnp.float32)   # (L, 1)
        inputs.append(obT)
        in_specs.append(pl.BlockSpec((L, 1), lambda i, j: (0, 0)))

    # Explicit VMEM budget: double-buffered in/out blocks + h intermediates,
    # 2x headroom, capped below the v7x usable VMEM.
    n_streams = 2 if span_bias else 1
    est = (2 * tile_i * L * tile_j * 4
           + 2 * (tile_i + tile_j) * R * 4 * n_streams
           + 2 * tile_j * R * 4 * n_streams
           + 4 * (L * R + 2 * R + L) * n_streams)
    vmem_limit = int(min(max(2 * est, 32 << 20), 48 << 20))

    kernel = _make_kernel(activation, span_bias, label_bias, tile_i)
    out_t = pl.pallas_call(
        kernel,
        out_shape=jax.ShapeDtypeStruct((Mp, L, Mp), jnp.float32),
        grid=(Mp // tile_i, Mp // tile_j),
        in_specs=in_specs,
        out_specs=pl.BlockSpec((tile_i, L, tile_j), lambda i, j: (i, 0, j)),
        compiler_params=pltpu.CompilerParams(
            dimension_semantics=("parallel", "parallel"),
            vmem_limit_bytes=vmem_limit),
    )(*inputs)

    # Kernel layout (i, label, j) -> module layout (i, j, label); crop padding.
    return jnp.transpose(out_t[:M, :, :M], (0, 2, 1))


def fencepost_reference(x, params, *, disentangle=False, span_bias=False,
                        label_bias=True, activation="tanh"):
    """Plain-JAX reference matching the PyTorch forward (high precision)."""
    act = _activation(activation)
    T, D = x.shape
    if disentangle:
        x = jnp.concatenate([x[:, 0::2], x[:, 1::2]], axis=1)
    half = D // 2
    f = jnp.concatenate([x[:-1, :half], -x[1:, half:]], axis=1)
    M = T - 1
    sf = (f[None, :, :] - f[:, None, :]).reshape(M * M, D)
    hp = lax.Precision.HIGHEST
    h = act(jnp.dot(sf, params["label_w"].T, precision=hp) + params["label_b"])
    out = jnp.dot(h, params["label_proj"], precision=hp)
    if span_bias:
        hs = act(jnp.dot(sf, params["span_w"].T, precision=hp) + params["span_b"])
        out = out + jnp.dot(hs, params["span_proj"], precision=hp)
    if label_bias:
        out = out + params["output_bias"]
    return out.reshape(M, M, -1)


if __name__ == "__main__":
    # --- Test 1: module defaults (tanh, label_bias=True, span_bias=False) ----
    n_words, D, R, L = 7, 32, 32, 8
    T = n_words + 2
    k = jax.random.split(jax.random.PRNGKey(0), 4)
    x = jax.random.normal(k[0], (T, D), dtype=jnp.float32)
    bound_w = (6.0 / (D + R)) ** 0.5      # xavier_uniform (tanh branch)
    bound_p = (6.0 / (R + L)) ** 0.5
    params = {
        "label_w": jax.random.uniform(k[1], (R, D), jnp.float32, -bound_w, bound_w),
        "label_b": jnp.zeros((R,), jnp.float32),
        "label_proj": jax.random.uniform(k[2], (R, L), jnp.float32, -bound_p, bound_p),
        "output_bias": jnp.zeros((1, L), jnp.float32),
    }
    out = jax.block_until_ready(fencepost_forward(x, params))
    ref = fencepost_reference(x, params)
    assert out.shape == (T - 1, T - 1, L), out.shape
    # Kernel matmul runs at default (bf16-pass) MXU precision -> loosened tol.
    err = float(jnp.max(jnp.abs(out - ref)))
    assert jnp.allclose(out, ref, atol=2e-2, rtol=2e-2), err

    # --- Test 2: span_bias + disentangle + relu + odd label count ------------
    n_words2, D2, R2, L2 = 20, 64, 48, 5
    T2 = n_words2 + 2
    k2 = jax.random.split(jax.random.PRNGKey(1), 8)
    x2 = jax.random.normal(k2[0], (T2, D2), dtype=jnp.float32)
    params2 = {
        "label_w": jax.random.uniform(k2[1], (R2, D2), jnp.float32, -0.3, 0.3),
        "label_b": 0.1 * jax.random.normal(k2[2], (R2,), jnp.float32),
        "label_proj": jax.random.uniform(k2[3], (R2, L2), jnp.float32, -0.3, 0.3),
        "span_w": jax.random.uniform(k2[4], (R2, D2), jnp.float32, -0.3, 0.3),
        "span_b": 0.1 * jax.random.normal(k2[5], (R2,), jnp.float32),
        "span_proj": jax.random.uniform(k2[6], (R2, 1), jnp.float32, -0.3, 0.3),
        "output_bias": 0.1 * jax.random.normal(k2[7], (1, L2), jnp.float32),
    }
    kwargs = dict(disentangle=True, span_bias=True, label_bias=True, activation="relu")
    out2 = jax.block_until_ready(fencepost_forward(x2, params2, **kwargs))
    ref2 = fencepost_reference(x2, params2, **kwargs)
    assert out2.shape == (T2 - 1, T2 - 1, L2), out2.shape
    err2 = float(jnp.max(jnp.abs(out2 - ref2)))
    assert jnp.allclose(out2, ref2, atol=2e-2, rtol=2e-2), err2

    print("KERNEL_OK")
</pallas_src>

<mosaic_0001>
module attributes {stable_mosaic.version = 11 : i64} {
  func.func @kernel(%arg0: i32, %arg1: i32, %arg2: memref<8x32xf32, #tpu.memory_space<vmem>>, %arg3: memref<8x32xf32, #tpu.memory_space<vmem>>, %arg4: memref<1x32xf32, #tpu.memory_space<vmem>>, %arg5: memref<8x32xf32, #tpu.memory_space<vmem>>, %arg6: memref<8x1xf32, #tpu.memory_space<vmem>>, %arg7: memref<8x8x8xf32, #tpu.memory_space<vmem>>) attributes {dimension_semantics = [#tpu.dimension_semantics<parallel>, #tpu.dimension_semantics<parallel>], iteration_bounds = array<i64: 1, 1>, scalar_prefetch = 0 : i64, scratch_operands = 0 : i64, tpu.core_type = #tpu.core_type<tc>, window_params = [{transform_indices = @transform_0, window_bounds = array<i64: 8, 32>}, {transform_indices = @transform_1, window_bounds = array<i64: 8, 32>}, {pipeline_mode = #tpu.pipeline_mode<synchronous>, transform_indices = @transform_2, window_bounds = array<i64: 1, 32>}, {pipeline_mode = #tpu.pipeline_mode<synchronous>, transform_indices = @transform_3, window_bounds = array<i64: 8, 32>}, {pipeline_mode = #tpu.pipeline_mode<synchronous>, transform_indices = @transform_4, window_bounds = array<i64: 8, 1>}, {transform_indices = @transform_5, window_bounds = array<i64: 8, 8, 8>}]} {
    %c0 = arith.constant 0 : index
    %c0_0 = arith.constant 0 : index
    %0 = vector.load %arg3[%c0, %c0_0] : memref<8x32xf32, #tpu.memory_space<vmem>>, vector<8x32xf32>
    %c0_1 = arith.constant 0 : index
    %c0_2 = arith.constant 0 : index
    %1 = vector.load %arg4[%c0_1, %c0_2] : memref<1x32xf32, #tpu.memory_space<vmem>>, vector<1x32xf32>
    %2 = vector.broadcast %1 : vector<1x32xf32> to vector<8x32xf32>
    %3 = arith.addf %0, %2 : vector<8x32xf32>
    %c0_3 = arith.constant 0 : index
    %c0_4 = arith.constant 0 : index
    %4 = vector.load %arg5[%c0_3, %c0_4] : memref<8x32xf32, #tpu.memory_space<vmem>>, vector<8x32xf32>
    %c0_5 = arith.constant 0 : index
    %c0_6 = arith.constant 0 : index
    %5 = vector.load %arg6[%c0_5, %c0_6] : memref<8x1xf32, #tpu.memory_space<vmem>>, vector<8x1xf32>
    %c0_i32 = arith.constant 0 : i32
    %6 = arith.index_cast %c0_i32 : i32 to index
    %c0_7 = arith.constant 0 : index
    %7 = vector.load %arg2[%6, %c0_7] : memref<8x32xf32, #tpu.memory_space<vmem>>, vector<1x32xf32>
    %8 = vector.broadcast %7 : vector<1x32xf32> to vector<8x32xf32>
    %9 = arith.subf %3, %8 : vector<8x32xf32>
    %10 = math.tanh %9 : vector<8x32xf32>
    %cst = arith.constant dense<0.000000e+00> : vector<8x8xf32>
    %11 = tpu.matmul %4, %10, %cst {dimension_numbers = #tpu.dot_dimension_numbers<[1], [1], [0], [0], [0, 0, 1, 0], [], []>} : vector<8x32xf32>, vector<8x32xf32>, vector<8x8xf32> -> vector<8x8xf32>
    %12 = vector.broadcast %5 : vector<8x1xf32> to vector<8x8xf32>
    %13 = arith.addf %11, %12 : vector<8x8xf32>
    %14 = arith.index_cast %c0_i32 : i32 to index
    %c0_8 = arith.constant 0 : index
    %c0_9 = arith.constant 0 : index
    %15 = vector.load %arg7[%14, %c0_8, %c0_9] : memref<8x8x8xf32, #tpu.memory_space<vmem>>, vector<1x8x8xf32>
    %16 = vector.shape_cast %15 : vector<1x8x8xf32> to vector<8x8xf32>
    %17 = vector.shape_cast %13 : vector<8x8xf32> to vector<1x8x8xf32>
    tpu.vector_store %arg7[%14, %c0_8, %c0_9], %17 {strides = array<i32>} : memref<8x8x8xf32, #tpu.memory_space<vmem>>, vector<1x8x8xf32>,
    %c1_i32 = arith.constant 1 : i32
    %18 = arith.index_cast %c1_i32 : i32 to index
    %c0_10 = arith.constant 0 : index
    %19 = vector.load %arg2[%18, %c0_10] : memref<8x32xf32, #tpu.memory_space<vmem>>, vector<1x32xf32>
    %20 = vector.broadcast %19 : vector<1x32xf32> to vector<8x32xf32>
    %21 = arith.subf %3, %20 : vector<8x32xf32>
    %22 = math.tanh %21 : vector<8x32xf32>
    %cst_11 = arith.constant dense<0.000000e+00> : vector<8x8xf32>
    %23 = tpu.matmul %4, %22, %cst_11 {dimension_numbers = #tpu.dot_dimension_numbers<[1], [1], [0], [0], [0, 0, 1, 0], [], []>} : vector<8x32xf32>, vector<8x32xf32>, vector<8x8xf32> -> vector<8x8xf32>
    %24 = vector.broadcast %5 : vector<8x1xf32> to vector<8x8xf32>
    %25 = arith.addf %23, %24 : vector<8x8xf32>
    %26 = arith.index_cast %c1_i32 : i32 to index
    %c0_12 = arith.constant 0 : index
    %c0_13 = arith.constant 0 : index
    %27 = vector.load %arg7[%26, %c0_12, %c0_13] : memref<8x8x8xf32, #tpu.memory_space<vmem>>, vector<1x8x8xf32>
    %28 = vector.shape_cast %27 : vector<1x8x8xf32> to vector<8x8xf32>
    %29 = vector.shape_cast %25 : vector<8x8xf32> to vector<1x8x8xf32>
    tpu.vector_store %arg7[%26, %c0_12, %c0_13], %29 {strides = array<i32>} : memref<8x8x8xf32, #tpu.memory_space<vmem>>, vector<1x8x8xf32>,
    %c2_i32 = arith.constant 2 : i32
    %30 = arith.index_cast %c2_i32 : i32 to index
    %c0_14 = arith.constant 0 : index
    %31 = vector.load %arg2[%30, %c0_14] : memref<8x32xf32, #tpu.memory_space<vmem>>, vector<1x32xf32>
    %32 = vector.broadcast %31 : vector<1x32xf32> to vector<8x32xf32>
    %33 = arith.subf %3, %32 : vector<8x32xf32>
    %34 = math.tanh %33 : vector<8x32xf32>
    %cst_15 = arith.constant dense<0.000000e+00> : vector<8x8xf32>
    %35 = tpu.matmul %4, %34, %cst_15 {dimension_numbers = #tpu.dot_dimension_numbers<[1], [1], [0], [0], [0, 0, 1, 0], [], []>} : vector<8x32xf32>, vector<8x32xf32>, vector<8x8xf32> -> vector<8x8xf32>
    %36 = vector.broadcast %5 : vector<8x1xf32> to vector<8x8xf32>
    %37 = arith.addf %35, %36 : vector<8x8xf32>
    %38 = arith.index_cast %c2_i32 : i32 to index
    %c0_16 = arith.constant 0 : index
    %c0_17 = arith.constant 0 : index
    %39 = vector.load %arg7[%38, %c0_16, %c0_17] : memref<8x8x8xf32, #tpu.memory_space<vmem>>, vector<1x8x8xf32>
    %40 = vector.shape_cast %39 : vector<1x8x8xf32> to vector<8x8xf32>
    %41 = vector.shape_cast %37 : vector<8x8xf32> to vector<1x8x8xf32>
    tpu.vector_store %arg7[%38, %c0_16, %c0_17], %41 {strides = array<i32>} : memref<8x8x8xf32, #tpu.memory_space<vmem>>, vector<1x8x8xf32>,
    %c3_i32 = arith.constant 3 : i32
    %42 = arith.index_cast %c3_i32 : i32 to index
    %c0_18 = arith.constant 0 : index
    %43 = vector.load %arg2[%42, %c0_18] : memref<8x32xf32, #tpu.memory_space<vmem>>, vector<1x32xf32>
    %44 = vector.broadcast %43 : vector<1x32xf32> to vector<8x32xf32>
    %45 = arith.subf %3, %44 : vector<8x32xf32>
    %46 = math.tanh %45 : vector<8x32xf32>
    %cst_19 = arith.constant dense<0.000000e+00> : vector<8x8xf32>
    %47 = tpu.matmul %4, %46, %cst_19 {dimension_numbers = #tpu.dot_dimension_numbers<[1], [1], [0], [0], [0, 0, 1, 0], [], []>} : vector<8x32xf32>, vector<8x32xf32>, vector<8x8xf32> -> vector<8x8xf32>
    %48 = vector.broadcast %5 : vector<8x1xf32> to vector<8x8xf32>
    %49 = arith.addf %47, %48 : vector<8x8xf32>
    %50 = arith.index_cast %c3_i32 : i32 to index
    %c0_20 = arith.constant 0 : index
    %c0_21 = arith.constant 0 : index
    %51 = vector.load %arg7[%50, %c0_20, %c0_21] : memref<8x8x8xf32, #tpu.memory_space<vmem>>, vector<1x8x8xf32>
    %52 = vector.shape_cast %51 : vector<1x8x8xf32> to vector<8x8xf32>
    %53 = vector.shape_cast %49 : vector<8x8xf32> to vector<1x8x8xf32>
    tpu.vector_store %arg7[%50, %c0_20, %c0_21], %53 {strides = array<i32>} : memref<8x8x8xf32, #tpu.memory_space<vmem>>, vector<1x8x8xf32>,
    %c4_i32 = arith.constant 4 : i32
    %54 = arith.index_cast %c4_i32 : i32 to index
    %c0_22 = arith.constant 0 : index
    %55 = vector.load %arg2[%54, %c0_22] : memref<8x32xf32, #tpu.memory_space<vmem>>, vector<1x32xf32>
    %56 = vector.broadcast %55 : vector<1x32xf32> to vector<8x32xf32>
    %57 = arith.subf %3, %56 : vector<8x32xf32>
    %58 = math.tanh %57 : vector<8x32xf32>
    %cst_23 = arith.constant dense<0.000000e+00> : vector<8x8xf32>
    %59 = tpu.matmul %4, %58, %cst_23 {dimension_numbers = #tpu.dot_dimension_numbers<[1], [1], [0], [0], [0, 0, 1, 0], [], []>} : vector<8x32xf32>, vector<8x32xf32>, vector<8x8xf32> -> vector<8x8xf32>
    %60 = vector.broadcast %5 : vector<8x1xf32> to vector<8x8xf32>
    %61 = arith.addf %59, %60 : vector<8x8xf32>
    %62 = arith.index_cast %c4_i32 : i32 to index
    %c0_24 = arith.constant 0 : index
    %c0_25 = arith.constant 0 : index
    %63 = vector.load %arg7[%62, %c0_24, %c0_25] : memref<8x8x8xf32, #tpu.memory_space<vmem>>, vector<1x8x8xf32>
    %64 = vector.shape_cast %63 : vector<1x8x8xf32> to vector<8x8xf32>
    %65 = vector.shape_cast %61 : vector<8x8xf32> to vector<1x8x8xf32>
    tpu.vector_store %arg7[%62, %c0_24, %c0_25], %65 {strides = array<i32>} : memref<8x8x8xf32, #tpu.memory_space<vmem>>, vector<1x8x8xf32>,
    %c5_i32 = arith.constant 5 : i32
    %66 = arith.index_cast %c5_i32 : i32 to index
    %c0_26 = arith.constant 0 : index
    %67 = vector.load %arg2[%66, %c0_26] : memref<8x32xf32, #tpu.memory_space<vmem>>, vector<1x32xf32>
    %68 = vector.broadcast %67 : vector<1x32xf32> to vector<8x32xf32>
    %69 = arith.subf %3, %68 : vector<8x32xf32>
    %70 = math.tanh %69 : vector<8x32xf32>
    %cst_27 = arith.constant dense<0.000000e+00> : vector<8x8xf32>
    %71 = tpu.matmul %4, %70, %cst_27 {dimension_numbers = #tpu.dot_dimension_numbers<[1], [1], [0], [0], [0, 0, 1, 0], [], []>} : vector<8x32xf32>, vector<8x32xf32>, vector<8x8xf32> -> vector<8x8xf32>
    %72 = vector.broadcast %5 : vector<8x1xf32> to vector<8x8xf32>
    %73 = arith.addf %71, %72 : vector<8x8xf32>
    %74 = arith.index_cast %c5_i32 : i32 to index
    %c0_28 = arith.constant 0 : index
    %c0_29 = arith.constant 0 : index
    %75 = vector.load %arg7[%74, %c0_28, %c0_29] : memref<8x8x8xf32, #tpu.memory_space<vmem>>, vector<1x8x8xf32>
    %76 = vector.shape_cast %75 : vector<1x8x8xf32> to vector<8x8xf32>
    %77 = vector.shape_cast %73 : vector<8x8xf32> to vector<1x8x8xf32>
    tpu.vector_store %arg7[%74, %c0_28, %c0_29], %77 {strides = array<i32>} : memref<8x8x8xf32, #tpu.memory_space<vmem>>, vector<1x8x8xf32>,
    %c6_i32 = arith.constant 6 : i32
    %78 = arith.index_cast %c6_i32 : i32 to index
    %c0_30 = arith.constant 0 : index
    %79 = vector.load %arg2[%78, %c0_30] : memref<8x32xf32, #tpu.memory_space<vmem>>, vector<1x32xf32>
    %80 = vector.broadcast %79 : vector<1x32xf32> to vector<8x32xf32>
    %81 = arith.subf %3, %80 : vector<8x32xf32>
    %82 = math.tanh %81 : vector<8x32xf32>
    %cst_31 = arith.constant dense<0.000000e+00> : vector<8x8xf32>
    %83 = tpu.matmul %4, %82, %cst_31 {dimension_numbers = #tpu.dot_dimension_numbers<[1], [1], [0], [0], [0, 0, 1, 0], [], []>} : vector<8x32xf32>, vector<8x32xf32>, vector<8x8xf32> -> vector<8x8xf32>
    %84 = vector.broadcast %5 : vector<8x1xf32> to vector<8x8xf32>
    %85 = arith.addf %83, %84 : vector<8x8xf32>
    %86 = arith.index_cast %c6_i32 : i32 to index
    %c0_32 = arith.constant 0 : index
    %c0_33 = arith.constant 0 : index
    %87 = vector.load %arg7[%86, %c0_32, %c0_33] : memref<8x8x8xf32, #tpu.memory_space<vmem>>, vector<1x8x8xf32>
    %88 = vector.shape_cast %87 : vector<1x8x8xf32> to vector<8x8xf32>
    %89 = vector.shape_cast %85 : vector<8x8xf32> to vector<1x8x8xf32>
    tpu.vector_store %arg7[%86, %c0_32, %c0_33], %89 {strides = array<i32>} : memref<8x8x8xf32, #tpu.memory_space<vmem>>, vector<1x8x8xf32>,
    %c7_i32 = arith.constant 7 : i32
    %90 = arith.index_cast %c7_i32 : i32 to index
    %c0_34 = arith.constant 0 : index
    %91 = vector.load %arg2[%90, %c0_34] : memref<8x32xf32, #tpu.memory_space<vmem>>, vector<1x32xf32>
    %92 = vector.broadcast %91 : vector<1x32xf32> to vector<8x32xf32>
    %93 = arith.subf %3, %92 : vector<8x32xf32>
    %94 = math.tanh %93 : vector<8x32xf32>
    %cst_35 = arith.constant dense<0.000000e+00> : vector<8x8xf32>
    %95 = tpu.matmul %4, %94, %cst_35 {dimension_numbers = #tpu.dot_dimension_numbers<[1], [1], [0], [0], [0, 0, 1, 0], [], []>} : vector<8x32xf32>, vector<8x32xf32>, vector<8x8xf32> -> vector<8x8xf32>
    %96 = vector.broadcast %5 : vector<8x1xf32> to vector<8x8xf32>
    %97 = arith.addf %95, %96 : vector<8x8xf32>
    %98 = arith.index_cast %c7_i32 : i32 to index
    %c0_36 = arith.constant 0 : index
    %c0_37 = arith.constant 0 : index
    %99 = vector.load %arg7[%98, %c0_36, %c0_37] : memref<8x8x8xf32, #tpu.memory_space<vmem>>, vector<1x8x8xf32>
    %100 = vector.shape_cast %99 : vector<1x8x8xf32> to vector<8x8xf32>
    %101 = vector.shape_cast %97 : vector<8x8xf32> to vector<1x8x8xf32>
    tpu.vector_store %arg7[%98, %c0_36, %c0_37], %101 {strides = array<i32>} : memref<8x8x8xf32, #tpu.memory_space<vmem>>, vector<1x8x8xf32>,
    %c8_i32 = arith.constant 8 : i32
    return
  }
  func.func @transform_0(%arg0: i32, %arg1: i32) -> (i32, i32) {
    %c0_i32 = arith.constant 0 : i32
    %c0_i32_0 = arith.constant 0 : i32
    return %arg0, %c0_i32 : i32, i32
  }
  func.func @transform_1(%arg0: i32, %arg1: i32) -> (i32, i32) {
    %c0_i32 = arith.constant 0 : i32
    %c0_i32_0 = arith.constant 0 : i32
    return %arg1, %c0_i32 : i32, i32
  }
  func.func @transform_2(%arg0: i32, %arg1: i32) -> (i32, i32) {
    %c0_i32 = arith.constant 0 : i32
    %c0_i32_0 = arith.constant 0 : i32
    %c0_i32_1 = arith.constant 0 : i32
    return %c0_i32, %c0_i32_0 : i32, i32
  }
  func.func @transform_3(%arg0: i32, %arg1: i32) -> (i32, i32) {
    %c0_i32 = arith.constant 0 : i32
    %c0_i32_0 = arith.constant 0 : i32
    %c0_i32_1 = arith.constant 0 : i32
    return %c0_i32, %c0_i32_0 : i32, i32
  }
  func.func @transform_4(%arg0: i32, %arg1: i32) -> (i32, i32) {
    %c0_i32 = arith.constant 0 : i32
    %c0_i32_0 = arith.constant 0 : i32
    %c0_i32_1 = arith.constant 0 : i32
    return %c0_i32, %c0_i32_0 : i32, i32
  }
  func.func @transform_5(%arg0: i32, %arg1: i32) -> (i32, i32, i32) {
    %c0_i32 = arith.constant 0 : i32
    %c0_i32_0 = arith.constant 0 : i32
    return %arg0, %c0_i32, %arg1 : i32, i32, i32
  }
}

</mosaic_0001>

<llo_original>
// kernel: tpu_custom_call.1
$region0: #{tpu_custom_call.1}
  #allocation0 [shape = 'u32[]', space=smem, size = 0x4, offset = 0x4, fixed_abs, tag = 'smem constant byte address 0x4 - core index']
  #allocation1 [shape = 'u32[144,128]{1,0:T(1,128)}', space=vmem, size = 0x12000, scoped, tag = 'internal scratch']
  %s0 = inlined_call_operand.vmem [shape: f32[8,32], index: 0, kind: input, shape index: {}]
  %s1 = inlined_call_operand.hbm [shape: f32[8,32], index: 1, kind: input, shape index: {}]
  %s2 = inlined_call_operand.hbm [shape: f32[1,32], index: 2, kind: input, shape index: {}]
  %s3 = inlined_call_operand.vmem [shape: f32[8,32], index: 3, kind: input, shape index: {}]
  %s4 = inlined_call_operand.vmem [shape: f32[8,1], index: 4, kind: input, shape index: {}]
  %s5 = inlined_call_operand.hbm [shape: f32[8,8,8], index: 5, kind: output, shape index: {}]
  %s6 = sld [smem:[#allocation0]]
  $region38: #{tpu_custom_call.1} parent=0
    _
  %s8 = ssub.s32 1, %s6
  %s9 = scalar_select 0, %s8, %s6
  $region1: #{tpu_custom_call.1} parent=0
    #allocation2 [shape = 'u8[4096]{0}', space=vmem, size = 0x1000, scoped, tag = 'input window, operand 1, single buffered']
    #allocation3 [shape = 's32[1]{0}', space=sflag, size = 0x4, scoped, tag = 'scoped memory for tpu_custom_call.1']
    #allocation4 [shape = 's32[1]{0}', space=sflag, size = 0x4, scoped, tag = 'scoped memory for tpu_custom_call.1']
    #allocation5 [shape = 'u8[512]{0}', space=vmem, size = 0x400, scoped, tag = 'input window, operand 2, single buffered']
    #allocation6 [shape = 's32[1]{0}', space=sflag, size = 0x4, scoped, tag = 'scoped memory for tpu_custom_call.1']
    #allocation7 [shape = 'u8[32768]{0}', space=vmem, size = 0x8000, scoped, tag = 'output window, operand 0, single buffered']
    %10 = vsyncpa [#allocation3], 0
    %11 = vsyncpa [#allocation6], 0
    %12 = vsyncpa [#allocation4], 0
    // Predicated region
    $region2: #{tpu_custom_call.1} parent=1 // pred_check
      _
    $region3: #{tpu_custom_call.1} parent=1 // pred_check_branch
      %14 = sbr.rel (0) target = $region5
    $region4: #{tpu_custom_call.1} parent=1 // pred_region
      _
    $region5: #{tpu_custom_call.1} parent=1 // pred_fallthru
      _
    // Predicated region
    $region6: #{tpu_custom_call.1} parent=1 // pred_check
      _
    $region7: #{tpu_custom_call.1} parent=1 // pred_check_branch
      %16 = sbr.rel (0) target = $region9
    $region8: #{tpu_custom_call.1} parent=1 // pred_region
      %s18 = ssub.s32 128, 128
      %19 = vsyncadd [#allocation3], %s18
      %s21 = sshll.u32 [#allocation2], 4
      %s22 = int_to_ptr.vmem [resolvable:$true] %s21
      %24 = dma.hbm_to_vmem [thread:$0]  %s1, 128, %s22, [#allocation3]
    $region9: #{tpu_custom_call.1} parent=1 // pred_fallthru
      _
    // Predicated region
    $region10: #{tpu_custom_call.1} parent=1 // pred_check
      _
    $region11: #{tpu_custom_call.1} parent=1 // pred_check_branch
      %26 = sbr.rel (0) target = $region13
    $region12: #{tpu_custom_call.1} parent=1 // pred_region
      %s28 = ssub.s32 16, 16
      %29 = vsyncadd [#allocation6], %s28
      %s31 = sshll.u32 [#allocation5], 4
      %s32 = int_to_ptr.vmem [resolvable:$true] %s31
      %34 = dma.hbm_to_vmem [thread:$0]  %s2, 16, %s32, [#allocation6]
    $region13: #{tpu_custom_call.1} parent=1 // pred_fallthru
      _
    // Predicated region
    $region14: #{tpu_custom_call.1} parent=1 // pred_check
      _
    $region15: #{tpu_custom_call.1} parent=1 // pred_check_branch
      %36 = sbr.rel (0) target = $region17
    $region16: #{tpu_custom_call.1} parent=1 // pred_region
      _
    $region17: #{tpu_custom_call.1} parent=1 // pred_fallthru
      _
    // Predicated region
    $region18: #{tpu_custom_call.1} parent=1 // pred_check
      _
    $region19: #{tpu_custom_call.1} parent=1 // pred_check_branch
      %38 = sbr.rel (0) target = $region21
    $region20: #{tpu_custom_call.1} parent=1 // pred_region
      _
    $region21: #{tpu_custom_call.1} parent=1 // pred_fallthru
      _
    // Predicated region
    $region22: #{tpu_custom_call.1} parent=1 // pred_check
      _
    $region23: #{tpu_custom_call.1} parent=1 // pred_check_branch
      %40 = sbr.rel (0) target = $region25
    $region24: #{tpu_custom_call.1} parent=1 // pred_region
      %41 = dma.done [#allocation3], 128
    $region25: #{tpu_custom_call.1} parent=1 // pred_fallthru
      _
    // Predicated region
    $region26: #{tpu_custom_call.1} parent=1 // pred_check
      _
    $region27: #{tpu_custom_call.1} parent=1 // pred_check_branch
      %43 = sbr.rel (0) target = $region29
    $region28: #{tpu_custom_call.1} parent=1 // pred_region
      %44 = dma.done [#allocation6], 16
    $region29: #{tpu_custom_call.1} parent=1 // pred_fallthru
      _
    %v45 = vld [vmem:[#allocation2] sm:$0xff]
    %v46 = vld [vmem:[#allocation5] sm:$0x1]
    %v48 = vlaneseq
    %v49 = vshrl.u32 %v48, 7
    %v50 = vsub.s32 0, %v49
    %v51 = vrot.slane %v46, %v50
    %v53 = vadd.f32 %v45, %v51
    %v54 = vld [vmem:[%s3] sm:$0xff]
    %v55 = vld [vmem:[%s4] sm:$0xff]
    %v56 = vld [vmem:[%s0] sm:$0x1]
    %v57 = vlaneseq
    %v58 = vshrl.u32 %v57, 7
    %v59 = vsub.s32 0, %v58
    %v60 = vrot.slane %v56, %v59
    %v61 = vsub.f32 %v53, %v60
    %v62 = vtanh.pop %v61
    %64 = vset.pattern.permute.xlu0 0
    %65 = vperm.xlu0 %64, %v55
    %v66 = vpop.permute.xlu0 %65
    %vm68 = vcmask 261120
    %v70 = vsel %vm68, %v54, 0
    %v73 = vsel %vm68, %v62, 0
    %75 = vmatprep.subr.mxu0 0.0
    %76 = vmatpush1.xpose.msra.mxu0 %v73
    %77 = vmatprep.subr.mxu0 0.0
    %78 = vmatpush1.xpose.msra.mxu0 0.0
    %79 = vmatprep.subr.mxu0 0.0
    %80 = vmatpush1.xpose.msra.mxu0 0.0
    %81 = vmatprep.subr.mxu0 0.0
    %82 = vmatpush1.xpose.msra.mxu0 0.0
    %83 = vmatprep.subr.mxu0 0.0
    %84 = vmatpush1.xpose.msra.mxu0 0.0
    %85 = vmatprep.subr.mxu0 0.0
    %86 = vmatpush1.xpose.msra.mxu0 0.0
    %87 = vmatprep.subr.mxu0 0.0
    %88 = vmatpush1.xpose.msra.mxu0 0.0
    %89 = vmatprep.subr.mxu0 0.0
    %90 = vmatpush1.xpose.msra.mxu0 0.0
    %91 = vmatprep.subr.mxu0 0.0
    %92 = vmatpush1.xpose.msra.mxu0 0.0
    %93 = vmatprep.subr.mxu0 0.0
    %94 = vmatpush1.xpose.msra.mxu0 0.0
    %95 = vmatprep.subr.mxu0 0.0
    %96 = vmatpush1.xpose.msra.mxu0 0.0
    %97 = vmatprep.subr.mxu0 0.0
    %98 = vmatpush1.xpose.msra.mxu0 0.0
    %99 = vmatprep.subr.mxu0 0.0
    %100 = vmatpush1.xpose.msra.mxu0 0.0
    %101 = vmatprep.subr.mxu0 0.0
    %102 = vmatpush1.xpose.msra.mxu0 0.0
    %103 = vmatprep.subr.mxu0 0.0
    %104 = vmatpush1.xpose.msra.mxu0 0.0
    %105 = vmatprep.subr.mxu0 0.0
    %106 = vmatpush1.xpose.msra.mxu0 0.0
    %107 = vmatprep.subr.mxu0 0.0
    %108 = vmatpush1.xpose.msra.mxu0 0.0
    %109 = vmatprep.subr.mxu0 0.0
    %110 = vmatpush1.xpose.msra.mxu0 0.0
    %111 = vmatprep.subr.mxu0 0.0
    %112 = vmatpush1.xpose.msra.mxu0 0.0
    %113 = vmatprep.subr.mxu0 0.0
    %114 = vmatpush1.xpose.msra.mxu0 0.0
    %115 = vmatprep.subr.mxu0 0.0
    %116 = vmatpush1.xpose.msra.mxu0 0.0
    %117 = vmatprep.subr.mxu0 0.0
    %118 = vmatpush1.xpose.msra.mxu0 0.0
    %119 = vmatprep.subr.mxu0 0.0
    %120 = vmatpush1.xpose.msra.mxu0 0.0
    %121 = vmatprep.subr.mxu0 0.0
    %122 = vmatpush1.xpose.msra.mxu0 0.0
    %123 = vmatprep.subr.mxu0 0.0
    %124 = vmatpush1.xpose.msra.mxu0 0.0
    %125 = vmatprep.subr.mxu0 0.0
    %126 = vmatpush1.xpose.msra.mxu0 0.0
    %127 = vmatprep.subr.mxu0 0.0
    %128 = vmatpush1.xpose.msra.mxu0 0.0
    %129 = vmatprep.subr.mxu0 0.0
    %130 = vmatpush1.xpose.msra.mxu0 0.0
    %131 = vmatprep.subr.mxu0 0.0
    %132 = vmatpush1.xpose.msra.mxu0 0.0
    %133 = vmatprep.subr.mxu0 0.0
    %134 = vmatpush1.xpose.msra.mxu0 0.0
    %135 = vmatprep.subr.mxu0 0.0
    %136 = vmatpush1.xpose.msra.mxu0 0.0
    %137 = vmatprep.subr.mxu0 0.0
    %138 = vmatpush1.xpose.msra.mxu0 0.0
    %139 = vmatprep.mubr.f32.mxu0 0.0
    %140 = vmatmul.mubr.f32.gmra.mrb[0].mxu0 %v70
    %v141 = vpop.f32.mrb[0].mxu0
    %v142 = vadd.f32 %v66, %v141
    %v143 = vpop.f32.mrb[0].mxu0
    %144 = vdwg.mxu0
    %vm145 = vcmask 64512
    %146 = vst.msk [vmem:[#allocation7] sm:$0xff] %vm145, %v142
    %v147 = vld [vmem:[%s0 + $0x1] sm:$0x1]
    %v148 = vlaneseq
    %v149 = vshrl.u32 %v148, 7
    %v150 = vsub.s32 0, %v149
    %v151 = vrot.slane %v147, %v150
    %v152 = vsub.f32 %v53, %v151
    %v153 = vtanh.pop %v152
    %v155 = vsel %vm68, %v153, 0
    %157 = vmatprep.subr.mxu0 0.0
    %158 = vmatpush1.xpose.msra.mxu0 %v155
    %159 = vmatprep.subr.mxu0 0.0
    %160 = vmatpush1.xpose.msra.mxu0 0.0
    %161 = vmatprep.subr.mxu0 0.0
    %162 = vmatpush1.xpose.msra.mxu0 0.0
    %163 = vmatprep.subr.mxu0 0.0
    %164 = vmatpush1.xpose.msra.mxu0 0.0
    %165 = vmatprep.subr.mxu0 0.0
    %166 = vmatpush1.xpose.msra.mxu0 0.0
    %167 = vmatprep.subr.mxu0 0.0
    %168 = vmatpush1.xpose.msra.mxu0 0.0
    %169 = vmatprep.subr.mxu0 0.0
    %170 = vmatpush1.xpose.msra.mxu0 0.0
    %171 = vmatprep.subr.mxu0 0.0
    %172 = vmatpush1.xpose.msra.mxu0 0.0
    %173 = vmatprep.subr.mxu0 0.0
    %174 = vmatpush1.xpose.msra.mxu0 0.0
    %175 = vmatprep.subr.mxu0 0.0
    %176 = vmatpush1.xpose.msra.mxu0 0.0
    %177 = vmatprep.subr.mxu0 0.0
    %178 = vmatpush1.xpose.msra.mxu0 0.0
    %179 = vmatprep.subr.mxu0 0.0
    %180 = vmatpush1.xpose.msra.mxu0 0.0
    %181 = vmatprep.subr.mxu0 0.0
    %182 = vmatpush1.xpose.msra.mxu0 0.0
    %183 = vmatprep.subr.mxu0 0.0
    %184 = vmatpush1.xpose.msra.mxu0 0.0
    %185 = vmatprep.subr.mxu0 0.0
    %186 = vmatpush1.xpose.msra.mxu0 0.0
    %187 = vmatprep.subr.mxu0 0.0
    %188 = vmatpush1.xpose.msra.mxu0 0.0
    %189 = vmatprep.subr.mxu0 0.0
    %190 = vmatpush1.xpose.msra.mxu0 0.0
    %191 = vmatprep.subr.mxu0 0.0
    %192 = vmatpush1.xpose.msra.mxu0 0.0
    %193 = vmatprep.subr.mxu0 0.0
    %194 = vmatpush1.xpose.msra.mxu0 0.0
    %195 = vmatprep.subr.mxu0 0.0
    %196 = vmatpush1.xpose.msra.mxu0 0.0
    %197 = vmatprep.subr.mxu0 0.0
    %198 = vmatpush1.xpose.msra.mxu0 0.0
    %199 = vmatprep.subr.mxu0 0.0
    %200 = vmatpush1.xpose.msra.mxu0 0.0
    %201 = vmatprep.subr.mxu0 0.0
    %202 = vmatpush1.xpose.msra.mxu0 0.0
    %203 = vmatprep.subr.mxu0 0.0
    %204 = vmatpush1.xpose.msra.mxu0 0.0
    %205 = vmatprep.subr.mxu0 0.0
    %206 = vmatpush1.xpose.msra.mxu0 0.0
    %207 = vmatprep.subr.mxu0 0.0
    %208 = vmatpush1.xpose.msra.mxu0 0.0
    %209 = vmatprep.subr.mxu0 0.0
    %210 = vmatpush1.xpose.msra.mxu0 0.0
    %211 = vmatprep.subr.mxu0 0.0
    %212 = vmatpush1.xpose.msra.mxu0 0.0
    %213 = vmatprep.subr.mxu0 0.0
    %214 = vmatpush1.xpose.msra.mxu0 0.0
    %215 = vmatprep.subr.mxu0 0.0
    %216 = vmatpush1.xpose.msra.mxu0 0.0
    %217 = vmatprep.subr.mxu0 0.0
    %218 = vmatpush1.xpose.msra.mxu0 0.0
    %219 = vmatprep.subr.mxu0 0.0
    %220 = vmatpush1.xpose.msra.mxu0 0.0
    %221 = vmatprep.mubr.f32.mxu0 0.0
    %222 = vmatmul.mubr.f32.gmra.mrb[0].mxu0 %v70
    %v223 = vpop.f32.mrb[0].mxu0
    %v224 = vadd.f32 %v66, %v223
    %v225 = vpop.f32.mrb[0].mxu0
    %226 = vdwg.mxu0
    %s227 = scalar_lea.vmem [#allocation7], 8
    %228 = vst.msk [vmem:[%s227] sm:$0xff] %vm145, %v224
    %v229 = vld [vmem:[%s0 + $0x2] sm:$0x1]
    %v230 = vlaneseq
    %v231 = vshrl.u32 %v230, 7
    %v232 = vsub.s32 0, %v231
    %v233 = vrot.slane %v229, %v232
    %v234 = vsub.f32 %v53, %v233
    %v235 = vtanh.pop %v234
    %v237 = vsel %vm68, %v235, 0
    %239 = vmatprep.subr.mxu0 0.0
    %240 = vmatpush1.xpose.msra.mxu0 %v237
    %241 = vmatprep.subr.mxu0 0.0
    %242 = vmatpush1.xpose.msra.mxu0 0.0
    %243 = vmatprep.subr.mxu0 0.0
    %244 = vmatpush1.xpose.msra.mxu0 0.0
    %245 = vmatprep.subr.mxu0 0.0
    %246 = vmatpush1.xpose.msra.mxu0 0.0
    %247 = vmatprep.subr.mxu0 0.0
    %248 = vmatpush1.xpose.msra.mxu0 0.0
    %249 = vmatprep.subr.mxu0 0.0
    %250 = vmatpush1.xpose.msra.mxu0 0.0
    %251 = vmatprep.subr.mxu0 0.0
    %252 = vmatpush1.xpose.msra.mxu0 0.0
    %253 = vmatprep.subr.mxu0 0.0
    %254 = vmatpush1.xpose.msra.mxu0 0.0
    %255 = vmatprep.subr.mxu0 0.0
    %256 = vmatpush1.xpose.msra.mxu0 0.0
    %257 = vmatprep.subr.mxu0 0.0
    %258 = vmatpush1.xpose.msra.mxu0 0.0
    %259 = vmatprep.subr.mxu0 0.0
    %260 = vmatpush1.xpose.msra.mxu0 0.0
    %261 = vmatprep.subr.mxu0 0.0
    %262 = vmatpush1.xpose.msra.mxu0 0.0
    %263 = vmatprep.subr.mxu0 0.0
    %264 = vmatpush1.xpose.msra.mxu0 0.0
    %265 = vmatprep.subr.mxu0 0.0
    %266 = vmatpush1.xpose.msra.mxu0 0.0
    %267 = vmatprep.subr.mxu0 0.0
    %268 = vmatpush1.xpose.msra.mxu0 0.0
    %269 = vmatprep.subr.mxu0 0.0
    %270 = vmatpush1.xpose.msra.mxu0 0.0
    %271 = vmatprep.subr.mxu0 0.0
    %272 = vmatpush1.xpose.msra.mxu0 0.0
    %273 = vmatprep.subr.mxu0 0.0
    %274 = vmatpush1.xpose.msra.mxu0 0.0
    %275 = vmatprep.subr.mxu0 0.0
    %276 = vmatpush1.xpose.msra.mxu0 0.0
    %277 = vmatprep.subr.mxu0 0.0
    %278 = vmatpush1.xpose.msra.mxu0 0.0
    %279 = vmatprep.subr.mxu0 0.0
    %280 = vmatpush1.xpose.msra.mxu0 0.0
    %281 = vmatprep.subr.mxu0 0.0
    %282 = vmatpush1.xpose.msra.mxu0 0.0
    %283 = vmatprep.subr.mxu0 0.0
    %284 = vmatpush1.xpose.msra.mxu0 0.0
    %285 = vmatprep.subr.mxu0 0.0
    %286 = vmatpush1.xpose.msra.mxu0 0.0
    %287 = vmatprep.subr.mxu0 0.0
    %288 = vmatpush1.xpose.msra.mxu0 0.0
    %289 = vmatprep.subr.mxu0 0.0
    %290 = vmatpush1.xpose.msra.mxu0 0.0
    %291 = vmatprep.subr.mxu0 0.0
    %292 = vmatpush1.xpose.msra.mxu0 0.0
    %293 = vmatprep.subr.mxu0 0.0
    %294 = vmatpush1.xpose.msra.mxu0 0.0
    %295 = vmatprep.subr.mxu0 0.0
    %296 = vmatpush1.xpose.msra.mxu0 0.0
    %297 = vmatprep.subr.mxu0 0.0
    %298 = vmatpush1.xpose.msra.mxu0 0.0
    %299 = vmatprep.subr.mxu0 0.0
    %300 = vmatpush1.xpose.msra.mxu0 0.0
    %301 = vmatprep.subr.mxu0 0.0
    %302 = vmatpush1.xpose.msra.mxu0 0.0
    %303 = vmatprep.mubr.f32.mxu0 0.0
    %304 = vmatmul.mubr.f32.gmra.mrb[0].mxu0 %v70
    %v305 = vpop.f32.mrb[0].mxu0
    %v306 = vadd.f32 %v66, %v305
    %v307 = vpop.f32.mrb[0].mxu0
    %308 = vdwg.mxu0
    %s309 = scalar_lea.vmem [#allocation7], 16
    %310 = vst.msk [vmem:[%s309] sm:$0xff] %vm145, %v306
    %v311 = vld [vmem:[%s0 + $0x3] sm:$0x1]
    %v312 = vlaneseq
    %v313 = vshrl.u32 %v312, 7
    %v314 = vsub.s32 0, %v313
    %v315 = vrot.slane %v311, %v314
    %v316 = vsub.f32 %v53, %v315
    %v317 = vtanh.pop %v316
    %v319 = vsel %vm68, %v317, 0
    %321 = vmatprep.subr.mxu0 0.0
    %322 = vmatpush1.xpose.msra.mxu0 %v319
    %323 = vmatprep.subr.mxu0 0.0
    %324 = vmatpush1.xpose.msra.mxu0 0.0
    %325 = vmatprep.subr.mxu0 0.0
    %326 = vmatpush1.xpose.msra.mxu0 0.0
    %327 = vmatprep.subr.mxu0 0.0
    %328 = vmatpush1.xpose.msra.mxu0 0.0
    %329 = vmatprep.subr.mxu0 0.0
    %330 = vmatpush1.xpose.msra.mxu0 0.0
    %331 = vmatprep.subr.mxu0 0.0
    %332 = vmatpush1.xpose.msra.mxu0 0.0
    %333 = vmatprep.subr.mxu0 0.0
    %334 = vmatpush1.xpose.msra.mxu0 0.0
    %335 = vmatprep.subr.mxu0 0.0
    %336 = vmatpush1.xpose.msra.mxu0 0.0
    %337 = vmatprep.subr.mxu0 0.0
    %338 = vmatpush1.xpose.msra.mxu0 0.0
    %339 = vmatprep.subr.mxu0 0.0
    %340 = vmatpush1.xpose.msra.mxu0 0.0
    %341 = vmatprep.subr.mxu0 0.0
    %342 = vmatpush1.xpose.msra.mxu0 0.0
    %343 = vmatprep.subr.mxu0 0.0
    %344 = vmatpush1.xpose.msra.mxu0 0.0
    %345 = vmatprep.subr.mxu0 0.0
    %346 = vmatpush1.xpose.msra.mxu0 0.0
    %347 = vmatprep.subr.mxu0 0.0
    %348 = vmatpush1.xpose.msra.mxu0 0.0
    %349 = vmatprep.subr.mxu0 0.0
    %350 = vmatpush1.xpose.msra.mxu0 0.0
    %351 = vmatprep.subr.mxu0 0.0
    %352 = vmatpush1.xpose.msra.mxu0 0.0
    %353 = vmatprep.subr.mxu0 0.0
    %354 = vmatpush1.xpose.msra.mxu0 0.0
    %355 = vmatprep.subr.mxu0 0.0
    %356 = vmatpush1.xpose.msra.mxu0 0.0
    %357 = vmatprep.subr.mxu0 0.0
    %358 = vmatpush1.xpose.msra.mxu0 0.0
    %359 = vmatprep.subr.mxu0 0.0
    %360 = vmatpush1.xpose.msra.mxu0 0.0
    %361 = vmatprep.subr.mxu0 0.0
    %362 = vmatpush1.xpose.msra.mxu0 0.0
    %363 = vmatprep.subr.mxu0 0.0
    %364 = vmatpush1.xpose.msra.mxu0 0.0
    %365 = vmatprep.subr.mxu0 0.0
    %366 = vmatpush1.xpose.msra.mxu0 0.0
    %367 = vmatprep.subr.mxu0 0.0
    %368 = vmatpush1.xpose.msra.mxu0 0.0
    %369 = vmatprep.subr.mxu0 0.0
    %370 = vmatpush1.xpose.msra.mxu0 0.0
    %371 = vmatprep.subr.mxu0 0.0
    %372 = vmatpush1.xpose.msra.mxu0 0.0
    %373 = vmatprep.subr.mxu0 0.0
    %374 = vmatpush1.xpose.msra.mxu0 0.0
    %375 = vmatprep.subr.mxu0 0.0
    %376 = vmatpush1.xpose.msra.mxu0 0.0
    %377 = vmatprep.subr.mxu0 0.0
    %378 = vmatpush1.xpose.msra.mxu0 0.0
    %379 = vmatprep.subr.mxu0 0.0
    %380 = vmatpush1.xpose.msra.mxu0 0.0
    %381 = vmatprep.subr.mxu0 0.0
    %382 = vmatpush1.xpose.msra.mxu0 0.0
    %383 = vmatprep.subr.mxu0 0.0
    %384 = vmatpush1.xpose.msra.mxu0 0.0
    %385 = vmatprep.mubr.f32.mxu0 0.0
    %386 = vmatmul.mubr.f32.gmra.mrb[0].mxu0 %v70
    %v387 = vpop.f32.mrb[0].mxu0
    %v388 = vadd.f32 %v66, %v387
    %v389 = vpop.f32.mrb[0].mxu0
    %390 = vdwg.mxu0
    %s391 = scalar_lea.vmem [#allocation7], 24
    %392 = vst.msk [vmem:[%s391] sm:$0xff] %vm145, %v388
    %v393 = vld [vmem:[%s0 + $0x4] sm:$0x1]
    %v394 = vlaneseq
    %v395 = vshrl.u32 %v394, 7
    %v396 = vsub.s32 0, %v395
    %v397 = vrot.slane %v393, %v396
    %v398 = vsub.f32 %v53, %v397
    %v399 = vtanh.pop %v398
    %v401 = vsel %vm68, %v399, 0
    %403 = vmatprep.subr.mxu0 0.0
    %404 = vmatpush1.xpose.msra.mxu0 %v401
    %405 = vmatprep.subr.mxu0 0.0
    %406 = vmatpush1.xpose.msra.mxu0 0.0
    %407 = vmatprep.subr.mxu0 0.0
    %408 = vmatpush1.xpose.msra.mxu0 0.0
    %409 = vmatprep.subr.mxu0 0.0
    %410 = vmatpush1.xpose.msra.mxu0 0.0
    %411 = vmatprep.subr.mxu0 0.0
    %412 = vmatpush1.xpose.msra.mxu0 0.0
    %413 = vmatprep.subr.mxu0 0.0
    %414 = vmatpush1.xpose.msra.mxu0 0.0
    %415 = vmatprep.subr.mxu0 0.0
    %416 = vmatpush1.xpose.msra.mxu0 0.0
    %417 = vmatprep.subr.mxu0 0.0
    %418 = vmatpush1.xpose.msra.mxu0 0.0
    %419 = vmatprep.subr.mxu0 0.0
    %420 = vmatpush1.xpose.msra.mxu0 0.0
    %421 = vmatprep.subr.mxu0 0.0
    %422 = vmatpush1.xpose.msra.mxu0 0.0
    %423 = vmatprep.subr.mxu0 0.0
    %424 = vmatpush1.xpose.msra.mxu0 0.0
    %425 = vmatprep.subr.mxu0 0.0
    %426 = vmatpush1.xpose.msra.mxu0 0.0
    %427 = vmatprep.subr.mxu0 0.0
    %428 = vmatpush1.xpose.msra.mxu0 0.0
    %429 = vmatprep.subr.mxu0 0.0
    %430 = vmatpush1.xpose.msra.mxu0 0.0
    %431 = vmatprep.subr.mxu0 0.0
    %432 = vmatpush1.xpose.msra.mxu0 0.0
    %433 = vmatprep.subr.mxu0 0.0
    %434 = vmatpush1.xpose.msra.mxu0 0.0
    %435 = vmatprep.subr.mxu0 0.0
    %436 = vmatpush1.xpose.msra.mxu0 0.0
    %437 = vmatprep.subr.mxu0 0.0
    %438 = vmatpush1.xpose.msra.mxu0 0.0
    %439 = vmatprep.subr.mxu0 0.0
    %440 = vmatpush1.xpose.msra.mxu0 0.0
    %441 = vmatprep.subr.mxu0 0.0
    %442 = vmatpush1.xpose.msra.mxu0 0.0
    %443 = vmatprep.subr.mxu0 0.0
    %444 = vmatpush1.xpose.msra.mxu0 0.0
    %445 = vmatprep.subr.mxu0 0.0
    %446 = vmatpush1.xpose.msra.mxu0 0.0
    %447 = vmatprep.subr.mxu0 0.0
    %448 = vmatpush1.xpose.msra.mxu0 0.0
    %449 = vmatprep.subr.mxu0 0.0
    %450 = vmatpush1.xpose.msra.mxu0 0.0
    %451 = vmatprep.subr.mxu0 0.0
    %452 = vmatpush1.xpose.msra.mxu0 0.0
    %453 = vmatprep.subr.mxu0 0.0
    %454 = vmatpush1.xpose.msra.mxu0 0.0
    %455 = vmatprep.subr.mxu0 0.0
    %456 = vmatpush1.xpose.msra.mxu0 0.0
    %457 = vmatprep.subr.mxu0 0.0
    %458 = vmatpush1.xpose.msra.mxu0 0.0
    %459 = vmatprep.subr.mxu0 0.0
    %460 = vmatpush1.xpose.msra.mxu0 0.0
    %461 = vmatprep.subr.mxu0 0.0
    %462 = vmatpush1.xpose.msra.mxu0 0.0
    %463 = vmatprep.subr.mxu0 0.0
    %464 = vmatpush1.xpose.msra.mxu0 0.0
    %465 = vmatprep.subr.mxu0 0.0
    %466 = vmatpush1.xpose.msra.mxu0 0.0
    %467 = vmatprep.mubr.f32.mxu0 0.0
    %468 = vmatmul.mubr.f32.gmra.mrb[0].mxu0 %v70
    %v469 = vpop.f32.mrb[0].mxu0
    %v470 = vadd.f32 %v66, %v469
    %v471 = vpop.f32.mrb[0].mxu0
    %472 = vdwg.mxu0
    %s473 = scalar_lea.vmem [#allocation7], 32
    %474 = vst.msk [vmem:[%s473] sm:$0xff] %vm145, %v470
    %v475 = vld [vmem:[%s0 + $0x5] sm:$0x1]
    %v476 = vlaneseq
    %v477 = vshrl.u32 %v476, 7
    %v478 = vsub.s32 0, %v477
    %v479 = vrot.slane %v475, %v478
    %v480 = vsub.f32 %v53, %v479
    %v481 = vtanh.pop %v480
    %v483 = vsel %vm68, %v481, 0
    %485 = vmatprep.subr.mxu0 0.0
    %486 = vmatpush1.xpose.msra.mxu0 %v483
    %487 = vmatprep.subr.mxu0 0.0
    %488 = vmatpush1.xpose.msra.mxu0 0.0
    %489 = vmatprep.subr.mxu0 0.0
    %490 = vmatpush1.xpose.msra.mxu0 0.0
    %491 = vmatprep.subr.mxu0 0.0
    %492 = vmatpush1.xpose.msra.mxu0 0.0
    %493 = vmatprep.subr.mxu0 0.0
    %494 = vmatpush1.xpose.msra.mxu0 0.0
    %495 = vmatprep.subr.mxu0 0.0
    %496 = vmatpush1.xpose.msra.mxu0 0.0
    %497 = vmatprep.subr.mxu0 0.0
    %498 = vmatpush1.xpose.msra.mxu0 0.0
    %499 = vmatprep.subr.mxu0 0.0
    %500 = vmatpush1.xpose.msra.mxu0 0.0
    %501 = vmatprep.subr.mxu0 0.0
    %502 = vmatpush1.xpose.msra.mxu0 0.0
    %503 = vmatprep.subr.mxu0 0.0
    %504 = vmatpush1.xpose.msra.mxu0 0.0
    %505 = vmatprep.subr.mxu0 0.0
    %506 = vmatpush1.xpose.msra.mxu0 0.0
    %507 = vmatprep.subr.mxu0 0.0
    %508 = vmatpush1.xpose.msra.mxu0 0.0
    %509 = vmatprep.subr.mxu0 0.0
    %510 = vmatpush1.xpose.msra.mxu0 0.0
    %511 = vmatprep.subr.mxu0 0.0
    %512 = vmatpush1.xpose.msra.mxu0 0.0
    %513 = vmatprep.subr.mxu0 0.0
    %514 = vmatpush1.xpose.msra.mxu0 0.0
    %515 = vmatprep.subr.mxu0 0.0
    %516 = vmatpush1.xpose.msra.mxu0 0.0
    %517 = vmatprep.subr.mxu0 0.0
    %518 = vmatpush1.xpose.msra.mxu0 0.0
    %519 = vmatprep.subr.mxu0 0.0
    %520 = vmatpush1.xpose.msra.mxu0 0.0
    %521 = vmatprep.subr.mxu0 0.0
    %522 = vmatpush1.xpose.msra.mxu0 0.0
    %523 = vmatprep.subr.mxu0 0.0
    %524 = vmatpush1.xpose.msra.mxu0 0.0
    %525 = vmatprep.subr.mxu0 0.0
    %526 = vmatpush1.xpose.msra.mxu0 0.0
    %527 = vmatprep.subr.mxu0 0.0
    %528 = vmatpush1.xpose.msra.mxu0 0.0
    %529 = vmatprep.subr.mxu0 0.0
    %530 = vmatpush1.xpose.msra.mxu0 0.0
    %531 = vmatprep.subr.mxu0 0.0
    %532 = vmatpush1.xpose.msra.mxu0 0.0
    %533 = vmatprep.subr.mxu0 0.0
    %534 = vmatpush1.xpose.msra.mxu0 0.0
    %535 = vmatprep.subr.mxu0 0.0
    %536 = vmatpush1.xpose.msra.mxu0 0.0
    %537 = vmatprep.subr.mxu0 0.0
    %538 = vmatpush1.xpose.msra.mxu0 0.0
    %539 = vmatprep.subr.mxu0 0.0
    %540 = vmatpush1.xpose.msra.mxu0 0.0
    %541 = vmatprep.subr.mxu0 0.0
    %542 = vmatpush1.xpose.msra.mxu0 0.0
    %543 = vmatprep.subr.mxu0 0.0
    %544 = vmatpush1.xpose.msra.mxu0 0.0
    %545 = vmatprep.subr.mxu0 0.0
    %546 = vmatpush1.xpose.msra.mxu0 0.0
    %547 = vmatprep.subr.mxu0 0.0
    %548 = vmatpush1.xpose.msra.mxu0 0.0
    %549 = vmatprep.mubr.f32.mxu0 0.0
    %550 = vmatmul.mubr.f32.gmra.mrb[0].mxu0 %v70
    %v551 = vpop.f32.mrb[0].mxu0
    %v552 = vadd.f32 %v66, %v551
    %v553 = vpop.f32.mrb[0].mxu0
    %554 = vdwg.mxu0
    %s555 = scalar_lea.vmem [#allocation7], 40
    %556 = vst.msk [vmem:[%s555] sm:$0xff] %vm145, %v552
    %v557 = vld [vmem:[%s0 + $0x6] sm:$0x1]
    %v558 = vlaneseq
    %v559 = vshrl.u32 %v558, 7
    %v560 = vsub.s32 0, %v559
    %v561 = vrot.slane %v557, %v560
    %v562 = vsub.f32 %v53, %v561
    %v563 = vtanh.pop %v562
    %v565 = vsel %vm68, %v563, 0
    %567 = vmatprep.subr.mxu0 0.0
    %568 = vmatpush1.xpose.msra.mxu0 %v565
    %569 = vmatprep.subr.mxu0 0.0
    %570 = vmatpush1.xpose.msra.mxu0 0.0
    %571 = vmatprep.subr.mxu0 0.0
    %572 = vmatpush1.xpose.msra.mxu0 0.0
    %573 = vmatprep.subr.mxu0 0.0
    %574 = vmatpush1.xpose.msra.mxu0 0.0
    %575 = vmatprep.subr.mxu0 0.0
    %576 = vmatpush1.xpose.msra.mxu0 0.0
    %577 = vmatprep.subr.mxu0 0.0
    %578 = vmatpush1.xpose.msra.mxu0 0.0
    %579 = vmatprep.subr.mxu0 0.0
    %580 = vmatpush1.xpose.msra.mxu0 0.0
    %581 = vmatprep.subr.mxu0 0.0
    %582 = vmatpush1.xpose.msra.mxu0 0.0
    %583 = vmatprep.subr.mxu0 0.0
    %584 = vmatpush1.xpose.msra.mxu0 0.0
    %585 = vmatprep.subr.mxu0 0.0
    %586 = vmatpush1.xpose.msra.mxu0 0.0
    %587 = vmatprep.subr.mxu0 0.0
    %588 = vmatpush1.xpose.msra.mxu0 0.0
    %589 = vmatprep.subr.mxu0 0.0
    %590 = vmatpush1.xpose.msra.mxu0 0.0
    %591 = vmatprep.subr.mxu0 0.0
    %592 = vmatpush1.xpose.msra.mxu0 0.0
    %593 = vmatprep.subr.mxu0 0.0
    %594 = vmatpush1.xpose.msra.mxu0 0.0
    %595 = vmatprep.subr.mxu0 0.0
    %596 = vmatpush1.xpose.msra.mxu0 0.0
    %597 = vmatprep.subr.mxu0 0.0
    %598 = vmatpush1.xpose.msra.mxu0 0.0
    %599 = vmatprep.subr.mxu0 0.0
    %600 = vmatpush1.xpose.msra.mxu0 0.0
    %601 = vmatprep.subr.mxu0 0.0
    %602 = vmatpush1.xpose.msra.mxu0 0.0
    %603 = vmatprep.subr.mxu0 0.0
    %604 = vmatpush1.xpose.msra.mxu0 0.0
    %605 = vmatprep.subr.mxu0 0.0
    %606 = vmatpush1.xpose.msra.mxu0 0.0
    %607 = vmatprep.subr.mxu0 0.0
    %608 = vmatpush1.xpose.msra.mxu0 0.0
    %609 = vmatprep.subr.mxu0 0.0
    %610 = vmatpush1.xpose.msra.mxu0 0.0
    %611 = vmatprep.subr.mxu0 0.0
    %612 = vmatpush1.xpose.msra.mxu0 0.0
    %613 = vmatprep.subr.mxu0 0.0
    %614 = vmatpush1.xpose.msra.mxu0 0.0
    %615 = vmatprep.subr.mxu0 0.0
    %616 = vmatpush1.xpose.msra.mxu0 0.0
    %617 = vmatprep.subr.mxu0 0.0
    %618 = vmatpush1.xpose.msra.mxu0 0.0
    %619 = vmatprep.subr.mxu0 0.0
    %620 = vmatpush1.xpose.msra.mxu0 0.0
    %621 = vmatprep.subr.mxu0 0.0
    %622 = vmatpush1.xpose.msra.mxu0 0.0
    %623 = vmatprep.subr.mxu0 0.0
    %624 = vmatpush1.xpose.msra.mxu0 0.0
    %625 = vmatprep.subr.mxu0 0.0
    %626 = vmatpush1.xpose.msra.mxu0 0.0
    %627 = vmatprep.subr.mxu0 0.0
    %628 = vmatpush1.xpose.msra.mxu0 0.0
    %629 = vmatprep.subr.mxu0 0.0
    %630 = vmatpush1.xpose.msra.mxu0 0.0
    %631 = vmatprep.mubr.f32.mxu0 0.0
    %632 = vmatmul.mubr.f32.gmra.mrb[0].mxu0 %v70
    %v633 = vpop.f32.mrb[0].mxu0
    %v634 = vadd.f32 %v66, %v633
    %v635 = vpop.f32.mrb[0].mxu0
    %636 = vdwg.mxu0
    %s637 = scalar_lea.vmem [#allocation7], 48
    %638 = vst.msk [vmem:[%s637] sm:$0xff] %vm145, %v634
    %v639 = vld [vmem:[%s0 + $0x7] sm:$0x1]
    %v640 = vlaneseq
    %v641 = vshrl.u32 %v640, 7
    %v642 = vsub.s32 0, %v641
    %v643 = vrot.slane %v639, %v642
    %v644 = vsub.f32 %v53, %v643
    %v645 = vtanh.pop %v644
    %v647 = vsel %vm68, %v645, 0
    %649 = vmatprep.subr.mxu0 0.0
    %650 = vmatpush1.xpose.msra.mxu0 %v647
    %651 = vmatprep.subr.mxu0 0.0
    %652 = vmatpush1.xpose.msra.mxu0 0.0
    %653 = vmatprep.subr.mxu0 0.0
    %654 = vmatpush1.xpose.msra.mxu0 0.0
    %655 = vmatprep.subr.mxu0 0.0
    %656 = vmatpush1.xpose.msra.mxu0 0.0
    %657 = vmatprep.subr.mxu0 0.0
    %658 = vmatpush1.xpose.msra.mxu0 0.0
    %659 = vmatprep.subr.mxu0 0.0
    %660 = vmatpush1.xpose.msra.mxu0 0.0
    %661 = vmatprep.subr.mxu0 0.0
    %662 = vmatpush1.xpose.msra.mxu0 0.0
    %663 = vmatprep.subr.mxu0 0.0
    %664 = vmatpush1.xpose.msra.mxu0 0.0
    %665 = vmatprep.subr.mxu0 0.0
    %666 = vmatpush1.xpose.msra.mxu0 0.0
    %667 = vmatprep.subr.mxu0 0.0
    %668 = vmatpush1.xpose.msra.mxu0 0.0
    %669 = vmatprep.subr.mxu0 0.0
    %670 = vmatpush1.xpose.msra.mxu0 0.0
    %671 = vmatprep.subr.mxu0 0.0
    %672 = vmatpush1.xpose.msra.mxu0 0.0
    %673 = vmatprep.subr.mxu0 0.0
    %674 = vmatpush1.xpose.msra.mxu0 0.0
    %675 = vmatprep.subr.mxu0 0.0
    %676 = vmatpush1.xpose.msra.mxu0 0.0
    %677 = vmatprep.subr.mxu0 0.0
    %678 = vmatpush1.xpose.msra.mxu0 0.0
    %679 = vmatprep.subr.mxu0 0.0
    %680 = vmatpush1.xpose.msra.mxu0 0.0
    %681 = vmatprep.subr.mxu0 0.0
    %682 = vmatpush1.xpose.msra.mxu0 0.0
    %683 = vmatprep.subr.mxu0 0.0
    %684 = vmatpush1.xpose.msra.mxu0 0.0
    %685 = vmatprep.subr.mxu0 0.0
    %686 = vmatpush1.xpose.msra.mxu0 0.0
    %687 = vmatprep.subr.mxu0 0.0
    %688 = vmatpush1.xpose.msra.mxu0 0.0
    %689 = vmatprep.subr.mxu0 0.0
    %690 = vmatpush1.xpose.msra.mxu0 0.0
    %691 = vmatprep.subr.mxu0 0.0
    %692 = vmatpush1.xpose.msra.mxu0 0.0
    %693 = vmatprep.subr.mxu0 0.0
    %694 = vmatpush1.xpose.msra.mxu0 0.0
    %695 = vmatprep.subr.mxu0 0.0
    %696 = vmatpush1.xpose.msra.mxu0 0.0
    %697 = vmatprep.subr.mxu0 0.0
    %698 = vmatpush1.xpose.msra.mxu0 0.0
    %699 = vmatprep.subr.mxu0 0.0
    %700 = vmatpush1.xpose.msra.mxu0 0.0
    %701 = vmatprep.subr.mxu0 0.0
    %702 = vmatpush1.xpose.msra.mxu0 0.0
    %703 = vmatprep.subr.mxu0 0.0
    %704 = vmatpush1.xpose.msra.mxu0 0.0
    %705 = vmatprep.subr.mxu0 0.0
    %706 = vmatpush1.xpose.msra.mxu0 0.0
    %707 = vmatprep.subr.mxu0 0.0
    %708 = vmatpush1.xpose.msra.mxu0 0.0
    %709 = vmatprep.subr.mxu0 0.0
    %710 = vmatpush1.xpose.msra.mxu0 0.0
    %711 = vmatprep.subr.mxu0 0.0
    %712 = vmatpush1.xpose.msra.mxu0 0.0
    %713 = vmatprep.mubr.f32.mxu0 0.0
    %714 = vmatmul.mubr.f32.gmra.mrb[0].mxu0 %v70
    %v715 = vpop.f32.mrb[0].mxu0
    %v716 = vadd.f32 %v66, %v715
    %v717 = vpop.f32.mrb[0].mxu0
    %718 = vdwg.mxu0
    %s719 = scalar_lea.vmem [#allocation7], 56
    %720 = vst.msk [vmem:[%s719] sm:$0xff] %vm145, %v716
    // Predicated region
    $region30: #{tpu_custom_call.1} parent=1 // pred_check
      _
    $region31: #{tpu_custom_call.1} parent=1 // pred_check_branch
      %722 = sbr.rel (0) target = $region33
    $region32: #{tpu_custom_call.1} parent=1 // pred_region
      %s724 = ssub.s32 1024, 1024
      %725 = vsyncadd [#allocation4], %s724
      %s726 = sshll.u32 [#allocation7], 4
      %s727 = int_to_ptr.vmem [resolvable:$true] %s726
      %732 = dma.vmem_to_hbm [thread:$0]  %s727, 1024, %s5, [#allocation4], 128, 128, 8
    $region33: #{tpu_custom_call.1} parent=1 // pred_fallthru
      _
    // Predicated region
    $region34: #{tpu_custom_call.1} parent=1 // pred_check
      _
    $region35: #{tpu_custom_call.1} parent=1 // pred_check_branch
      %734 = sbr.rel (0) target = $region37
    $region36: #{tpu_custom_call.1} parent=1 // pred_region
      %735 = dma.done [#allocation4], 1024
    $region37: #{tpu_custom_call.1} parent=1 // pred_fallthru
      _
    %736 = vsyncpa [#allocation3], 1
    %737 = vsyncpa [#allocation6], 1
    %738 = vsyncpa [#allocation4], 1

</llo_original>
